<compile_context>
chip_gen: v7x
topology: tpu7x:2x2x1
jax: 0.10.0
libtpu: 0.0.40
codegen_flags: <defaults>
</compile_context>

<pallas_src>
import math

import jax
import jax.numpy as jnp
from jax.experimental import pallas as pl
from jax.experimental.pallas import tpu as pltpu

LANE = 128


def _round_up(x, m):
    return ((x + m - 1) // m) * m


def _cdiv(a, b):
    return -(-a // b)


def perceptron_kernel(x_ref, w_ref, b_ref, o_ref):
    """One batch tile of sigmoid(x @ w + b).

    x_ref: [tm, k*D]  VMEM  - k consecutive batch rows packed per lane row
    w_ref: [k*D, k]   VMEM  - block-diagonal copies of the weight row (resident)
    b_ref: [1, 1]     SMEM  - bias scalar
    o_ref: [tm, k]    VMEM  - o[r, j] = sigmoid(<x[r*k + j, :], w> + b)
    """
    # K-reduction on the MXU (idle slot here); f32 accumulation, full-fidelity
    # f32 passes so results match the f32 torch reference.
    z = jnp.dot(
        x_ref[...],
        w_ref[...],
        preferred_element_type=jnp.float32,
        precision=jax.lax.Precision.HIGHEST,
    )
    z = z + b_ref[0, 0]
    # Exact sigmoid: EUP exp + divide; saturates correctly for large |z|.
    y = 1.0 / (1.0 + jnp.exp(-z))
    o_ref[...] = y.astype(o_ref.dtype)


def _plan(batch, d, itemsize, target_buf_bytes):
    """Pick (packing factor k, rows-per-step tm, grid steps)."""
    # Pack k consecutive batch rows per 128-lane packed row when D divides 128
    # and the (free, row-major) reshape is legal, i.e. k divides the batch.
    k = LANE // d if (d <= LANE and LANE % d == 0) else 1
    while k > 1 and batch % k:
        k //= 2
    n_rows = max(1, batch // k)                       # packed rows fed to the kernel

    # Bytes-per-step target (per x buffer) -> tm, multiple of 128 rows.
    row_bytes = _round_up(k * d, LANE) * itemsize     # VMEM bytes per packed row
    tm = max(LANE, (target_buf_bytes // row_bytes) // LANE * LANE)
    tm = min(tm, _round_up(n_rows, LANE))
    steps = _cdiv(n_rows, tm)

    # v7x megacore: prefer an even number of grid steps so both TensorCores
    # get equal work under dimension_semantics=("parallel",).
    if steps > 1 and steps % 2:
        tm2 = max(LANE, _round_up(_cdiv(n_rows, steps + 1), LANE))
        if _cdiv(n_rows, tm2) % 2 == 0:
            tm = tm2
        steps = _cdiv(n_rows, tm)
    return k, tm, steps


def perceptron_forward(x, weight, bias, *, target_buf_bytes=2 << 20):
    """sigmoid(x @ weight.T + bias).  x: [..., D], weight: [1, D], bias: scalar/[1]."""
    *lead, d = x.shape
    batch = int(math.prod(lead)) if lead else 1
    x2 = x.reshape(batch, d)

    itemsize = jnp.dtype(x.dtype).itemsize
    k, tm, steps = _plan(batch, d, itemsize, target_buf_bytes)
    n_rows = batch // k

    # Free row-major reshape (no data movement): pack k rows per packed row.
    x_view = x2.reshape(n_rows, k * d)

    # Block-diagonal weight [k*D, k]: column j carries w in rows j*D..(j+1)*D-1,
    # so z[r, j] = <x[r*k + j, :], w>.
    w_row = jnp.reshape(weight, (d,)).astype(jnp.float32)
    if k == 1:
        w_pack = w_row.reshape(d, 1)
    else:
        w_pack = (jnp.eye(k, dtype=jnp.float32)[:, None, :]
                  * w_row[None, :, None]).reshape(k * d, k)
    w_pack = w_pack.astype(x.dtype)                   # keep the dot in x's dtype

    b_smem = jnp.reshape(bias, (1, 1)).astype(jnp.float32)

    # VMEM budget from the (8,128)-padded, double-buffered tile footprints.
    x_buf = tm * _round_up(k * d, LANE) * itemsize
    o_buf = tm * LANE * itemsize                      # out block lane-pads k -> 128
    w_buf = _round_up(k * d, 8) * LANE * itemsize
    vmem_limit = int(min(max(2 * (x_buf + o_buf + w_buf) + (2 << 20), 8 << 20),
                         32 << 20))                   # safe on v7x's 64 MiB/TC too

    cost = pl.CostEstimate(
        flops=2 * batch * d,
        transcendentals=batch,
        bytes_accessed=batch * d * itemsize + (k * d) * k * itemsize + batch * itemsize,
    )

    out = pl.pallas_call(
        perceptron_kernel,
        out_shape=jax.ShapeDtypeStruct((n_rows, k), x.dtype),
        grid=(steps,),
        in_specs=[
            # Streamed batch tiles; Pallas clips the last partial block, so no
            # wrapper-side padding / extra HBM traffic.
            pl.BlockSpec((tm, k * d), lambda i: (i, 0)),
            # Weight stays VMEM-resident (constant index map -> fetched once).
            pl.BlockSpec((k * d, k), lambda i: (0, 0)),
            # Bias scalar in SMEM.
            pl.BlockSpec(memory_space=pltpu.MemorySpace.SMEM),
        ],
        out_specs=pl.BlockSpec((tm, k), lambda i: (i, 0)),
        compiler_params=pltpu.CompilerParams(
            dimension_semantics=("parallel",),
            vmem_limit_bytes=vmem_limit,
        ),
        cost_estimate=cost,
    )(x_view, w_pack, b_smem)

    # (n_rows, k) row-major == original batch order; free reshape back.
    return out.reshape(*lead, 1) if lead else out.reshape(1)


if __name__ == "__main__":
    key = jax.random.PRNGKey(0)
    k_w, k_b, k_x1, k_x2, k_w3, k_b3, k_x3 = jax.random.split(key, 7)

    # --- Case 1: input_size=32, batch=8 (packed path, k=4, single grid step) ---
    D = 32
    bound = 1.0 / float(D) ** 0.5          # nn.Linear default init range
    w = jax.random.uniform(k_w, (1, D), jnp.float32, -bound, bound)   # fc.weight
    b = jax.random.uniform(k_b, (1,), jnp.float32, -bound, bound)     # fc.bias

    x1 = jax.random.normal(k_x1, (8, D), jnp.float32)
    out1 = jax.block_until_ready(perceptron_forward(x1, w, b))
    ref1 = jax.nn.sigmoid(x1 @ w.T + b)
    assert out1.shape == (8, 1)
    assert jnp.allclose(out1, ref1, atol=1e-5, rtol=1e-5)

    # --- Case 2: batch=2100 with a tiny per-step budget -> multi-step grid with
    #     a clipped (partial) final block, still the packed path. ---
    x2 = jax.random.normal(k_x2, (2100, D), jnp.float32)
    out2 = jax.block_until_ready(
        perceptron_forward(x2, w, b, target_buf_bytes=64 << 10))
    ref2 = jax.nn.sigmoid(x2 @ w.T + b)
    assert out2.shape == (2100, 1)
    assert jnp.allclose(out2, ref2, atol=1e-5, rtol=1e-5)

    # --- Case 3: input_size=48 (does not divide 128 -> k=1 fallback path). ---
    D3 = 48
    bound3 = 1.0 / float(D3) ** 0.5
    w3 = jax.random.uniform(k_w3, (1, D3), jnp.float32, -bound3, bound3)
    b3 = jax.random.uniform(k_b3, (1,), jnp.float32, -bound3, bound3)
    x3 = jax.random.normal(k_x3, (10, D3), jnp.float32)
    out3 = jax.block_until_ready(perceptron_forward(x3, w3, b3))
    ref3 = jax.nn.sigmoid(x3 @ w3.T + b3)
    assert out3.shape == (10, 1)
    assert jnp.allclose(out3, ref3, atol=1e-5, rtol=1e-5)

    print("KERNEL_OK")
</pallas_src>

<mosaic_0001>
module attributes {stable_mosaic.version = 11 : i64} {
  func.func @perceptron_kernel(%arg0: i32, %arg1: memref<128x128xf32, #tpu.memory_space<vmem>>, %arg2: memref<128x4xf32, #tpu.memory_space<vmem>>, %arg3: memref<1x1xf32, #tpu.memory_space<smem>>, %arg4: memref<128x4xf32, #tpu.memory_space<vmem>>) attributes {dimension_semantics = [#tpu.dimension_semantics<parallel>], iteration_bounds = array<i64: 1>, scalar_prefetch = 0 : i64, scratch_operands = 0 : i64, tpu.core_type = #tpu.core_type<tc>, window_params = [{transform_indices = @transform_0, window_bounds = array<i64: 128, 128>}, {pipeline_mode = #tpu.pipeline_mode<synchronous>, transform_indices = @transform_1, window_bounds = array<i64: 128, 4>}, {transform_indices = @transform_2, window_bounds = array<i64: 1, 1>}, {transform_indices = @transform_3, window_bounds = array<i64: 128, 4>}]} {
    %c0 = arith.constant 0 : index
    %c0_0 = arith.constant 0 : index
    %0 = vector.load %arg1[%c0, %c0_0] : memref<128x128xf32, #tpu.memory_space<vmem>>, vector<128x128xf32>
    %c0_1 = arith.constant 0 : index
    %c0_2 = arith.constant 0 : index
    %1 = vector.load %arg2[%c0_1, %c0_2] : memref<128x4xf32, #tpu.memory_space<vmem>>, vector<128x4xf32>
    %cst = arith.constant dense<0.000000e+00> : vector<128x4xf32>
    %2 = tpu.matmul %0, %1, %cst {dimension_numbers = #tpu.dot_dimension_numbers<[1], [0], [0], [1], [0, 0, 1, 1], [], []>, precision = #tpu.contract_precision<fp32>} : vector<128x128xf32>, vector<128x4xf32>, vector<128x4xf32> -> vector<128x4xf32>
    %c0_3 = arith.constant 0 : index
    %c0_4 = arith.constant 0 : index
    %3 = memref.load %arg3[%c0_3, %c0_4] : memref<1x1xf32, #tpu.memory_space<smem>>
    %4 = vector.broadcast %3 : f32 to vector<128x4xf32>
    %5 = arith.addf %2, %4 : vector<128x4xf32>
    %cst_5 = arith.constant 0.000000e+00 : f32
    %6 = vector.broadcast %cst_5 : f32 to vector<128x4xf32>
    %7 = arith.subf %6, %5 : vector<128x4xf32>
    %8 = math.exp %7 : vector<128x4xf32>
    %cst_6 = arith.constant 1.000000e+00 : f32
    %9 = vector.broadcast %cst_6 : f32 to vector<128x4xf32>
    %10 = arith.addf %9, %8 : vector<128x4xf32>
    %cst_7 = arith.constant 1.000000e+00 : f32
    %11 = vector.broadcast %cst_7 : f32 to vector<128x4xf32>
    %12 = arith.divf %11, %10 : vector<128x4xf32>
    %c0_8 = arith.constant 0 : index
    %c0_9 = arith.constant 0 : index
    %13 = vector.load %arg4[%c0_8, %c0_9] : memref<128x4xf32, #tpu.memory_space<vmem>>, vector<128x4xf32>
    tpu.vector_store %arg4[%c0_8, %c0_9], %12 {strides = array<i32>} : memref<128x4xf32, #tpu.memory_space<vmem>>, vector<128x4xf32>,
    return
  }
  func.func @transform_0(%arg0: i32) -> (i32, i32) {
    %c0_i32 = arith.constant 0 : i32
    %c0_i32_0 = arith.constant 0 : i32
    return %arg0, %c0_i32 : i32, i32
  }
  func.func @transform_1(%arg0: i32) -> (i32, i32) {
    %c0_i32 = arith.constant 0 : i32
    %c0_i32_0 = arith.constant 0 : i32
    %c0_i32_1 = arith.constant 0 : i32
    return %c0_i32, %c0_i32_0 : i32, i32
  }
  func.func @transform_2(%arg0: i32) -> (i32, i32) {
    %c0_i32 = arith.constant 0 : i32
    %c0_i32_0 = arith.constant 0 : i32
    %c0_i32_1 = arith.constant 0 : i32
    return %c0_i32, %c0_i32_0 : i32, i32
  }
  func.func @transform_3(%arg0: i32) -> (i32, i32) {
    %c0_i32 = arith.constant 0 : i32
    %c0_i32_0 = arith.constant 0 : i32
    return %arg0, %c0_i32 : i32, i32
  }
}

</mosaic_0001>

<llo_original>
// kernel: tpu_custom_call.1
$region0: #{tpu_custom_call.1}
  #allocation0 [shape = 'u32[]', space=smem, size = 0x4, offset = 0x4, fixed_abs, tag = 'smem constant byte address 0x4 - core index']
  #allocation1 [shape = 'u32[144,128]{1,0:T(1,128)}', space=vmem, size = 0x12000, scoped, tag = 'internal scratch']
  #allocation2 [shape = 'f32[1,1]{1,0:T(1,128)S(6)}', space=smem, size = 0x200, scoped, tag = 'scoped memory for tpu_custom_call.1']
  %s0 = inlined_call_operand.vmem [shape: f32[2,128], index: 0, kind: input, shape index: {}]
  %s1 = inlined_call_operand.vmem [shape: f32[128,4], index: 1, kind: input, shape index: {}]
  %s2 = inlined_call_operand.<no memory space> [shape: f32[1,1], index: 2, kind: input, shape index: {}]
  %s3 = inlined_call_operand.hbm [shape: f32[2,4], index: 3, kind: output, shape index: {}]
  %s4 = sld [smem:[#allocation0]]
  $region22: #{tpu_custom_call.1} parent=0
    _
  %s6 = ssub.s32 1, %s4
  %s7 = scalar_select 0, %s6, %s4
  %8 = sst [smem:[#allocation2]] %s2
  $region1: #{tpu_custom_call.1} parent=0
    #allocation3 [shape = 'u8[65536]{0}', space=vmem, size = 0x10000, scoped, tag = 'output window, operand 0, single buffered']
    #allocation4 [shape = 's32[1]{0}', space=sflag, size = 0x4, scoped, tag = 'scoped memory for tpu_custom_call.1']
    %9 = vsyncpa [#allocation4], 0
    // Predicated region
    $region2: #{tpu_custom_call.1} parent=1 // pred_check
      _
    $region3: #{tpu_custom_call.1} parent=1 // pred_check_branch
      %11 = sbr.rel (0) target = $region5
    $region4: #{tpu_custom_call.1} parent=1 // pred_region
      _
    $region5: #{tpu_custom_call.1} parent=1 // pred_fallthru
      _
    // Predicated region
    $region6: #{tpu_custom_call.1} parent=1 // pred_check
      _
    $region7: #{tpu_custom_call.1} parent=1 // pred_check_branch
      %13 = sbr.rel (0) target = $region9
    $region8: #{tpu_custom_call.1} parent=1 // pred_region
      _
    $region9: #{tpu_custom_call.1} parent=1 // pred_fallthru
      _
    // Predicated region
    $region10: #{tpu_custom_call.1} parent=1 // pred_check
      _
    $region11: #{tpu_custom_call.1} parent=1 // pred_check_branch
      %15 = sbr.rel (0) target = $region13
    $region12: #{tpu_custom_call.1} parent=1 // pred_region
      _
    $region13: #{tpu_custom_call.1} parent=1 // pred_fallthru
      _
    %v16 = vld [vmem:[%s0] sm:$0xff]
    %v17 = vld [vmem:[%s0 + $0x8] sm:$0xff]
    %v18 = vld [vmem:[%s0 + $0x10] sm:$0xff]
    %v19 = vld [vmem:[%s0 + $0x18] sm:$0xff]
    %v20 = vld [vmem:[%s0 + $0x20] sm:$0xff]
    %v21 = vld [vmem:[%s0 + $0x28] sm:$0xff]
    %v22 = vld [vmem:[%s0 + $0x30] sm:$0xff]
    %v23 = vld [vmem:[%s0 + $0x38] sm:$0xff]
    %v24 = vld [vmem:[%s0 + $0x40] sm:$0xff]
    %v25 = vld [vmem:[%s0 + $0x48] sm:$0xff]
    %v26 = vld [vmem:[%s0 + $0x50] sm:$0xff]
    %v27 = vld [vmem:[%s0 + $0x58] sm:$0xff]
    %v28 = vld [vmem:[%s0 + $0x60] sm:$0xff]
    %v29 = vld [vmem:[%s0 + $0x68] sm:$0xff]
    %v30 = vld [vmem:[%s0 + $0x70] sm:$0xff]
    %v31 = vld [vmem:[%s0 + $0x78] sm:$0xff]
    %v32 = vld [vmem:[%s1] sm:$0xff]
    %v33 = vld [vmem:[%s1 + $0x8] sm:$0xff]
    %v34 = vld [vmem:[%s1 + $0x10] sm:$0xff]
    %v35 = vld [vmem:[%s1 + $0x18] sm:$0xff]
    %v36 = vld [vmem:[%s1 + $0x20] sm:$0xff]
    %v37 = vld [vmem:[%s1 + $0x28] sm:$0xff]
    %v38 = vld [vmem:[%s1 + $0x30] sm:$0xff]
    %v39 = vld [vmem:[%s1 + $0x38] sm:$0xff]
    %v40 = vld [vmem:[%s1 + $0x40] sm:$0xff]
    %v41 = vld [vmem:[%s1 + $0x48] sm:$0xff]
    %v42 = vld [vmem:[%s1 + $0x50] sm:$0xff]
    %v43 = vld [vmem:[%s1 + $0x58] sm:$0xff]
    %v44 = vld [vmem:[%s1 + $0x60] sm:$0xff]
    %v45 = vld [vmem:[%s1 + $0x68] sm:$0xff]
    %v46 = vld [vmem:[%s1 + $0x70] sm:$0xff]
    %v47 = vld [vmem:[%s1 + $0x78] sm:$0xff]
    %s48 = sld [smem:[#allocation2]]
    %v49 = vstv %s48
    %50 = vmatprep.subr.mxu0 0.0
    %v51 = vand.u32 %v32, 4294901760
    %52 = vmatpush1.msra.mxu0 %v51
    %53 = vmatprep.subr.mxu0 0.0
    %v54 = vand.u32 %v33, 4294901760
    %55 = vmatpush1.msra.mxu0 %v54
    %56 = vmatprep.subr.mxu0 0.0
    %v57 = vand.u32 %v34, 4294901760
    %58 = vmatpush1.msra.mxu0 %v57
    %59 = vmatprep.subr.mxu0 0.0
    %v60 = vand.u32 %v35, 4294901760
    %61 = vmatpush1.msra.mxu0 %v60
    %62 = vmatprep.subr.mxu0 0.0
    %v63 = vand.u32 %v36, 4294901760
    %64 = vmatpush1.msra.mxu0 %v63
    %65 = vmatprep.subr.mxu0 0.0
    %v66 = vand.u32 %v37, 4294901760
    %67 = vmatpush1.msra.mxu0 %v66
    %68 = vmatprep.subr.mxu0 0.0
    %v69 = vand.u32 %v38, 4294901760
    %70 = vmatpush1.msra.mxu0 %v69
    %71 = vmatprep.subr.mxu0 0.0
    %v72 = vand.u32 %v39, 4294901760
    %73 = vmatpush1.msra.mxu0 %v72
    %74 = vmatprep.subr.mxu0 0.0
    %v75 = vand.u32 %v40, 4294901760
    %76 = vmatpush1.msra.mxu0 %v75
    %77 = vmatprep.subr.mxu0 0.0
    %v78 = vand.u32 %v41, 4294901760
    %79 = vmatpush1.msra.mxu0 %v78
    %80 = vmatprep.subr.mxu0 0.0
    %v81 = vand.u32 %v42, 4294901760
    %82 = vmatpush1.msra.mxu0 %v81
    %83 = vmatprep.subr.mxu0 0.0
    %v84 = vand.u32 %v43, 4294901760
    %85 = vmatpush1.msra.mxu0 %v84
    %86 = vmatprep.subr.mxu0 0.0
    %v87 = vand.u32 %v44, 4294901760
    %88 = vmatpush1.msra.mxu0 %v87
    %89 = vmatprep.subr.mxu0 0.0
    %v90 = vand.u32 %v45, 4294901760
    %91 = vmatpush1.msra.mxu0 %v90
    %92 = vmatprep.subr.mxu0 0.0
    %v93 = vand.u32 %v46, 4294901760
    %94 = vmatpush1.msra.mxu0 %v93
    %95 = vmatprep.subr.mxu0 0.0
    %v96 = vand.u32 %v47, 4294901760
    %97 = vmatpush1.msra.mxu0 %v96
    %98 = vmatprep.subr.mxu0 0.0
    %99 = vmatpush1.msra.mxu0 0.0
    %100 = vmatprep.subr.mxu0 0.0
    %101 = vmatpush1.msra.mxu0 0.0
    %102 = vmatprep.subr.mxu0 0.0
    %103 = vmatpush1.msra.mxu0 0.0
    %104 = vmatprep.subr.mxu0 0.0
    %105 = vmatpush1.msra.mxu0 0.0
    %106 = vmatprep.subr.mxu0 0.0
    %107 = vmatpush1.msra.mxu0 0.0
    %108 = vmatprep.subr.mxu0 0.0
    %109 = vmatpush1.msra.mxu0 0.0
    %110 = vmatprep.subr.mxu0 0.0
    %111 = vmatpush1.msra.mxu0 0.0
    %112 = vmatprep.subr.mxu0 0.0
    %113 = vmatpush1.msra.mxu0 0.0
    %114 = vmatprep.subr.mxu0 0.0
    %115 = vmatpush1.msra.mxu0 0.0
    %116 = vmatprep.subr.mxu0 0.0
    %117 = vmatpush1.msra.mxu0 0.0
    %118 = vmatprep.subr.mxu0 0.0
    %119 = vmatpush1.msra.mxu0 0.0
    %120 = vmatprep.subr.mxu0 0.0
    %121 = vmatpush1.msra.mxu0 0.0
    %122 = vmatprep.subr.mxu0 0.0
    %123 = vmatpush1.msra.mxu0 0.0
    %124 = vmatprep.subr.mxu0 0.0
    %125 = vmatpush1.msra.mxu0 0.0
    %126 = vmatprep.subr.mxu0 0.0
    %127 = vmatpush1.msra.mxu0 0.0
    %128 = vmatprep.subr.mxu0 0.0
    %129 = vmatpush1.msra.mxu0 0.0
    %130 = vmatprep.mubr.f32.mxu0 0.0
    %v131 = vand.u32 %v16, 4294901760
    %v132 = vsub.f32 %v16, %v131
    %v133 = vand.u32 %v132, 4294901760
    %v134 = vsub.f32 %v132, %v133
    %v135 = vand.u32 %v134, 4294901760
    %136 = vmatmul.mubr.f32.gmra.mrb[0].mxu0 %v135
    %v137 = vpop.f32.mrb[0].mxu0
    %v138 = vadd.f32 %v49, %v137
    %v139 = vpop.f32.mrb[0].mxu0
    %140 = vmatprep.mubr.f32.mxu0 0.0
    %v141 = vand.u32 %v17, 4294901760
    %v142 = vsub.f32 %v17, %v141
    %v143 = vand.u32 %v142, 4294901760
    %v144 = vsub.f32 %v142, %v143
    %v145 = vand.u32 %v144, 4294901760
    %146 = vmatmul.mubr.f32.gmra.mrb[0].mxu0 %v145
    %v147 = vpop.f32.mrb[0].mxu0
    %v148 = vadd.f32 %v49, %v147
    %v149 = vpop.f32.mrb[0].mxu0
    %150 = vmatprep.mubr.f32.mxu0 0.0
    %v151 = vand.u32 %v18, 4294901760
    %v152 = vsub.f32 %v18, %v151
    %v153 = vand.u32 %v152, 4294901760
    %v154 = vsub.f32 %v152, %v153
    %v155 = vand.u32 %v154, 4294901760
    %156 = vmatmul.mubr.f32.gmra.mrb[0].mxu0 %v155
    %v157 = vpop.f32.mrb[0].mxu0
    %v158 = vadd.f32 %v49, %v157
    %v159 = vpop.f32.mrb[0].mxu0
    %160 = vmatprep.mubr.f32.mxu0 0.0
    %v161 = vand.u32 %v19, 4294901760
    %v162 = vsub.f32 %v19, %v161
    %v163 = vand.u32 %v162, 4294901760
    %v164 = vsub.f32 %v162, %v163
    %v165 = vand.u32 %v164, 4294901760
    %166 = vmatmul.mubr.f32.gmra.mrb[0].mxu0 %v165
    %v167 = vpop.f32.mrb[0].mxu0
    %v168 = vadd.f32 %v49, %v167
    %v169 = vpop.f32.mrb[0].mxu0
    %170 = vmatprep.mubr.f32.mxu0 0.0
    %v171 = vand.u32 %v20, 4294901760
    %v172 = vsub.f32 %v20, %v171
    %v173 = vand.u32 %v172, 4294901760
    %v174 = vsub.f32 %v172, %v173
    %v175 = vand.u32 %v174, 4294901760
    %176 = vmatmul.mubr.f32.gmra.mrb[0].mxu0 %v175
    %v177 = vpop.f32.mrb[0].mxu0
    %v178 = vadd.f32 %v49, %v177
    %v179 = vpop.f32.mrb[0].mxu0
    %180 = vmatprep.mubr.f32.mxu0 0.0
    %v181 = vand.u32 %v21, 4294901760
    %v182 = vsub.f32 %v21, %v181
    %v183 = vand.u32 %v182, 4294901760
    %v184 = vsub.f32 %v182, %v183
    %v185 = vand.u32 %v184, 4294901760
    %186 = vmatmul.mubr.f32.gmra.mrb[0].mxu0 %v185
    %v187 = vpop.f32.mrb[0].mxu0
    %v188 = vadd.f32 %v49, %v187
    %v189 = vpop.f32.mrb[0].mxu0
    %190 = vmatprep.mubr.f32.mxu0 0.0
    %v191 = vand.u32 %v22, 4294901760
    %v192 = vsub.f32 %v22, %v191
    %v193 = vand.u32 %v192, 4294901760
    %v194 = vsub.f32 %v192, %v193
    %v195 = vand.u32 %v194, 4294901760
    %196 = vmatmul.mubr.f32.gmra.mrb[0].mxu0 %v195
    %v197 = vpop.f32.mrb[0].mxu0
    %v198 = vadd.f32 %v49, %v197
    %v199 = vpop.f32.mrb[0].mxu0
    %200 = vmatprep.mubr.f32.mxu0 0.0
    %v201 = vand.u32 %v23, 4294901760
    %v202 = vsub.f32 %v23, %v201
    %v203 = vand.u32 %v202, 4294901760
    %v204 = vsub.f32 %v202, %v203
    %v205 = vand.u32 %v204, 4294901760
    %206 = vmatmul.mubr.f32.gmra.mrb[0].mxu0 %v205
    %v207 = vpop.f32.mrb[0].mxu0
    %v208 = vadd.f32 %v49, %v207
    %v209 = vpop.f32.mrb[0].mxu0
    %210 = vmatprep.mubr.f32.mxu0 0.0
    %v211 = vand.u32 %v24, 4294901760
    %v212 = vsub.f32 %v24, %v211
    %v213 = vand.u32 %v212, 4294901760
    %v214 = vsub.f32 %v212, %v213
    %v215 = vand.u32 %v214, 4294901760
    %216 = vmatmul.mubr.f32.gmra.mrb[0].mxu0 %v215
    %v217 = vpop.f32.mrb[0].mxu0
    %v218 = vadd.f32 %v49, %v217
    %v219 = vpop.f32.mrb[0].mxu0
    %220 = vmatprep.mubr.f32.mxu0 0.0
    %v221 = vand.u32 %v25, 4294901760
    %v222 = vsub.f32 %v25, %v221
    %v223 = vand.u32 %v222, 4294901760
    %v224 = vsub.f32 %v222, %v223
    %v225 = vand.u32 %v224, 4294901760
    %226 = vmatmul.mubr.f32.gmra.mrb[0].mxu0 %v225
    %v227 = vpop.f32.mrb[0].mxu0
    %v228 = vadd.f32 %v49, %v227
    %v229 = vpop.f32.mrb[0].mxu0
    %230 = vmatprep.mubr.f32.mxu0 0.0
    %v231 = vand.u32 %v26, 4294901760
    %v232 = vsub.f32 %v26, %v231
    %v233 = vand.u32 %v232, 4294901760
    %v234 = vsub.f32 %v232, %v233
    %v235 = vand.u32 %v234, 4294901760
    %236 = vmatmul.mubr.f32.gmra.mrb[0].mxu0 %v235
    %v237 = vpop.f32.mrb[0].mxu0
    %v238 = vadd.f32 %v49, %v237
    %v239 = vpop.f32.mrb[0].mxu0
    %240 = vmatprep.mubr.f32.mxu0 0.0
    %v241 = vand.u32 %v27, 4294901760
    %v242 = vsub.f32 %v27, %v241
    %v243 = vand.u32 %v242, 4294901760
    %v244 = vsub.f32 %v242, %v243
    %v245 = vand.u32 %v244, 4294901760
    %246 = vmatmul.mubr.f32.gmra.mrb[0].mxu0 %v245
    %v247 = vpop.f32.mrb[0].mxu0
    %v248 = vadd.f32 %v49, %v247
    %v249 = vpop.f32.mrb[0].mxu0
    %250 = vmatprep.mubr.f32.mxu0 0.0
    %v251 = vand.u32 %v28, 4294901760
    %v252 = vsub.f32 %v28, %v251
    %v253 = vand.u32 %v252, 4294901760
    %v254 = vsub.f32 %v252, %v253
    %v255 = vand.u32 %v254, 4294901760
    %256 = vmatmul.mubr.f32.gmra.mrb[0].mxu0 %v255
    %v257 = vpop.f32.mrb[0].mxu0
    %v258 = vadd.f32 %v49, %v257
    %v259 = vpop.f32.mrb[0].mxu0
    %260 = vmatprep.mubr.f32.mxu0 0.0
    %v261 = vand.u32 %v29, 4294901760
    %v262 = vsub.f32 %v29, %v261
    %v263 = vand.u32 %v262, 4294901760
    %v264 = vsub.f32 %v262, %v263
    %v265 = vand.u32 %v264, 4294901760
    %266 = vmatmul.mubr.f32.gmra.mrb[0].mxu0 %v265
    %v267 = vpop.f32.mrb[0].mxu0
    %v268 = vadd.f32 %v49, %v267
    %v269 = vpop.f32.mrb[0].mxu0
    %270 = vmatprep.mubr.f32.mxu0 0.0
    %v271 = vand.u32 %v30, 4294901760
    %v272 = vsub.f32 %v30, %v271
    %v273 = vand.u32 %v272, 4294901760
    %v274 = vsub.f32 %v272, %v273
    %v275 = vand.u32 %v274, 4294901760
    %276 = vmatmul.mubr.f32.gmra.mrb[0].mxu0 %v275
    %v277 = vpop.f32.mrb[0].mxu0
    %v278 = vadd.f32 %v49, %v277
    %v279 = vpop.f32.mrb[0].mxu0
    %280 = vmatprep.mubr.f32.mxu0 0.0
    %v281 = vand.u32 %v31, 4294901760
    %v282 = vsub.f32 %v31, %v281
    %v283 = vand.u32 %v282, 4294901760
    %v284 = vsub.f32 %v282, %v283
    %v285 = vand.u32 %v284, 4294901760
    %286 = vmatmul.mubr.f32.gmra.mrb[0].mxu0 %v285
    %v287 = vpop.f32.mrb[0].mxu0
    %v288 = vadd.f32 %v49, %v287
    %v289 = vpop.f32.mrb[0].mxu0
    %290 = vdwg.mxu0
    %291 = vmatprep.subr.mxu0 0.0
    %v292 = vand.u32 %v32, 4294901760
    %v293 = vsub.f32 %v32, %v292
    %v294 = vand.u32 %v293, 4294901760
    %v295 = vsub.f32 %v293, %v294
    %v296 = vand.u32 %v295, 4294901760
    %297 = vmatpush1.msra.mxu0 %v296
    %298 = vmatprep.subr.mxu0 0.0
    %v299 = vand.u32 %v33, 4294901760
    %v300 = vsub.f32 %v33, %v299
    %v301 = vand.u32 %v300, 4294901760
    %v302 = vsub.f32 %v300, %v301
    %v303 = vand.u32 %v302, 4294901760
    %304 = vmatpush1.msra.mxu0 %v303
    %305 = vmatprep.subr.mxu0 0.0
    %v306 = vand.u32 %v34, 4294901760
    %v307 = vsub.f32 %v34, %v306
    %v308 = vand.u32 %v307, 4294901760
    %v309 = vsub.f32 %v307, %v308
    %v310 = vand.u32 %v309, 4294901760
    %311 = vmatpush1.msra.mxu0 %v310
    %312 = vmatprep.subr.mxu0 0.0
    %v313 = vand.u32 %v35, 4294901760
    %v314 = vsub.f32 %v35, %v313
    %v315 = vand.u32 %v314, 4294901760
    %v316 = vsub.f32 %v314, %v315
    %v317 = vand.u32 %v316, 4294901760
    %318 = vmatpush1.msra.mxu0 %v317
    %319 = vmatprep.subr.mxu0 0.0
    %v320 = vand.u32 %v36, 4294901760
    %v321 = vsub.f32 %v36, %v320
    %v322 = vand.u32 %v321, 4294901760
    %v323 = vsub.f32 %v321, %v322
    %v324 = vand.u32 %v323, 4294901760
    %325 = vmatpush1.msra.mxu0 %v324
    %326 = vmatprep.subr.mxu0 0.0
    %v327 = vand.u32 %v37, 4294901760
    %v328 = vsub.f32 %v37, %v327
    %v329 = vand.u32 %v328, 4294901760
    %v330 = vsub.f32 %v328, %v329
    %v331 = vand.u32 %v330, 4294901760
    %332 = vmatpush1.msra.mxu0 %v331
    %333 = vmatprep.subr.mxu0 0.0
    %v334 = vand.u32 %v38, 4294901760
    %v335 = vsub.f32 %v38, %v334
    %v336 = vand.u32 %v335, 4294901760
    %v337 = vsub.f32 %v335, %v336
    %v338 = vand.u32 %v337, 4294901760
    %339 = vmatpush1.msra.mxu0 %v338
    %340 = vmatprep.subr.mxu0 0.0
    %v341 = vand.u32 %v39, 4294901760
    %v342 = vsub.f32 %v39, %v341
    %v343 = vand.u32 %v342, 4294901760
    %v344 = vsub.f32 %v342, %v343
    %v345 = vand.u32 %v344, 4294901760
    %346 = vmatpush1.msra.mxu0 %v345
    %347 = vmatprep.subr.mxu0 0.0
    %v348 = vand.u32 %v40, 4294901760
    %v349 = vsub.f32 %v40, %v348
    %v350 = vand.u32 %v349, 4294901760
    %v351 = vsub.f32 %v349, %v350
    %v352 = vand.u32 %v351, 4294901760
    %353 = vmatpush1.msra.mxu0 %v352
    %354 = vmatprep.subr.mxu0 0.0
    %v355 = vand.u32 %v41, 4294901760
    %v356 = vsub.f32 %v41, %v355
    %v357 = vand.u32 %v356, 4294901760
    %v358 = vsub.f32 %v356, %v357
    %v359 = vand.u32 %v358, 4294901760
    %360 = vmatpush1.msra.mxu0 %v359
    %361 = vmatprep.subr.mxu0 0.0
    %v362 = vand.u32 %v42, 4294901760
    %v363 = vsub.f32 %v42, %v362
    %v364 = vand.u32 %v363, 4294901760
    %v365 = vsub.f32 %v363, %v364
    %v366 = vand.u32 %v365, 4294901760
    %367 = vmatpush1.msra.mxu0 %v366
    %368 = vmatprep.subr.mxu0 0.0
    %v369 = vand.u32 %v43, 4294901760
    %v370 = vsub.f32 %v43, %v369
    %v371 = vand.u32 %v370, 4294901760
    %v372 = vsub.f32 %v370, %v371
    %v373 = vand.u32 %v372, 4294901760
    %374 = vmatpush1.msra.mxu0 %v373
    %375 = vmatprep.subr.mxu0 0.0
    %v376 = vand.u32 %v44, 4294901760
    %v377 = vsub.f32 %v44, %v376
    %v378 = vand.u32 %v377, 4294901760
    %v379 = vsub.f32 %v377, %v378
    %v380 = vand.u32 %v379, 4294901760
    %381 = vmatpush1.msra.mxu0 %v380
    %382 = vmatprep.subr.mxu0 0.0
    %v383 = vand.u32 %v45, 4294901760
    %v384 = vsub.f32 %v45, %v383
    %v385 = vand.u32 %v384, 4294901760
    %v386 = vsub.f32 %v384, %v385
    %v387 = vand.u32 %v386, 4294901760
    %388 = vmatpush1.msra.mxu0 %v387
    %389 = vmatprep.subr.mxu0 0.0
    %v390 = vand.u32 %v46, 4294901760
    %v391 = vsub.f32 %v46, %v390
    %v392 = vand.u32 %v391, 4294901760
    %v393 = vsub.f32 %v391, %v392
    %v394 = vand.u32 %v393, 4294901760
    %395 = vmatpush1.msra.mxu0 %v394
    %396 = vmatprep.subr.mxu0 0.0
    %v397 = vand.u32 %v47, 4294901760
    %v398 = vsub.f32 %v47, %v397
    %v399 = vand.u32 %v398, 4294901760
    %v400 = vsub.f32 %v398, %v399
    %v401 = vand.u32 %v400, 4294901760
    %402 = vmatpush1.msra.mxu0 %v401
    %403 = vmatprep.subr.mxu0 0.0
    %404 = vmatpush1.msra.mxu0 0.0
    %405 = vmatprep.subr.mxu0 0.0
    %406 = vmatpush1.msra.mxu0 0.0
    %407 = vmatprep.subr.mxu0 0.0
    %408 = vmatpush1.msra.mxu0 0.0
    %409 = vmatprep.subr.mxu0 0.0
    %410 = vmatpush1.msra.mxu0 0.0
    %411 = vmatprep.subr.mxu0 0.0
    %412 = vmatpush1.msra.mxu0 0.0
    %413 = vmatprep.subr.mxu0 0.0
    %414 = vmatpush1.msra.mxu0 0.0
    %415 = vmatprep.subr.mxu0 0.0
    %416 = vmatpush1.msra.mxu0 0.0
    %417 = vmatprep.subr.mxu0 0.0
    %418 = vmatpush1.msra.mxu0 0.0
    %419 = vmatprep.subr.mxu0 0.0
    %420 = vmatpush1.msra.mxu0 0.0
    %421 = vmatprep.subr.mxu0 0.0
    %422 = vmatpush1.msra.mxu0 0.0
    %423 = vmatprep.subr.mxu0 0.0
    %424 = vmatpush1.msra.mxu0 0.0
    %425 = vmatprep.subr.mxu0 0.0
    %426 = vmatpush1.msra.mxu0 0.0
    %427 = vmatprep.subr.mxu0 0.0
    %428 = vmatpush1.msra.mxu0 0.0
    %429 = vmatprep.subr.mxu0 0.0
    %430 = vmatpush1.msra.mxu0 0.0
    %431 = vmatprep.subr.mxu0 0.0
    %432 = vmatpush1.msra.mxu0 0.0
    %433 = vmatprep.subr.mxu0 0.0
    %434 = vmatpush1.msra.mxu0 0.0
    %435 = vmatprep.mubr.f32.mxu0 0.0
    %v436 = vand.u32 %v16, 4294901760
    %437 = vmatmul.mubr.f32.gmra.mrb[0].mxu0 %v436
    %v438 = vpop.f32.mrb[0].mxu0
    %v439 = vadd.f32 %v138, %v438
    %v440 = vpop.f32.mrb[0].mxu0
    %441 = vmatprep.mubr.f32.mxu0 0.0
    %v442 = vand.u32 %v17, 4294901760
    %443 = vmatmul.mubr.f32.gmra.mrb[0].mxu0 %v442
    %v444 = vpop.f32.mrb[0].mxu0
    %v445 = vadd.f32 %v148, %v444
    %v446 = vpop.f32.mrb[0].mxu0
    %447 = vmatprep.mubr.f32.mxu0 0.0
    %v448 = vand.u32 %v18, 4294901760
    %449 = vmatmul.mubr.f32.gmra.mrb[0].mxu0 %v448
    %v450 = vpop.f32.mrb[0].mxu0
    %v451 = vadd.f32 %v158, %v450
    %v452 = vpop.f32.mrb[0].mxu0
    %453 = vmatprep.mubr.f32.mxu0 0.0
    %v454 = vand.u32 %v19, 4294901760
    %455 = vmatmul.mubr.f32.gmra.mrb[0].mxu0 %v454
    %v456 = vpop.f32.mrb[0].mxu0
    %v457 = vadd.f32 %v168, %v456
    %v458 = vpop.f32.mrb[0].mxu0
    %459 = vmatprep.mubr.f32.mxu0 0.0
    %v460 = vand.u32 %v20, 4294901760
    %461 = vmatmul.mubr.f32.gmra.mrb[0].mxu0 %v460
    %v462 = vpop.f32.mrb[0].mxu0
    %v463 = vadd.f32 %v178, %v462
    %v464 = vpop.f32.mrb[0].mxu0
    %465 = vmatprep.mubr.f32.mxu0 0.0
    %v466 = vand.u32 %v21, 4294901760
    %467 = vmatmul.mubr.f32.gmra.mrb[0].mxu0 %v466
    %v468 = vpop.f32.mrb[0].mxu0
    %v469 = vadd.f32 %v188, %v468
    %v470 = vpop.f32.mrb[0].mxu0
    %471 = vmatprep.mubr.f32.mxu0 0.0
    %v472 = vand.u32 %v22, 4294901760
    %473 = vmatmul.mubr.f32.gmra.mrb[0].mxu0 %v472
    %v474 = vpop.f32.mrb[0].mxu0
    %v475 = vadd.f32 %v198, %v474
    %v476 = vpop.f32.mrb[0].mxu0
    %477 = vmatprep.mubr.f32.mxu0 0.0
    %v478 = vand.u32 %v23, 4294901760
    %479 = vmatmul.mubr.f32.gmra.mrb[0].mxu0 %v478
    %v480 = vpop.f32.mrb[0].mxu0
    %v481 = vadd.f32 %v208, %v480
    %v482 = vpop.f32.mrb[0].mxu0
    %483 = vmatprep.mubr.f32.mxu0 0.0
    %v484 = vand.u32 %v24, 4294901760
    %485 = vmatmul.mubr.f32.gmra.mrb[0].mxu0 %v484
    %v486 = vpop.f32.mrb[0].mxu0
    %v487 = vadd.f32 %v218, %v486
    %v488 = vpop.f32.mrb[0].mxu0
    %489 = vmatprep.mubr.f32.mxu0 0.0
    %v490 = vand.u32 %v25, 4294901760
    %491 = vmatmul.mubr.f32.gmra.mrb[0].mxu0 %v490
    %v492 = vpop.f32.mrb[0].mxu0
    %v493 = vadd.f32 %v228, %v492
    %v494 = vpop.f32.mrb[0].mxu0
    %495 = vmatprep.mubr.f32.mxu0 0.0
    %v496 = vand.u32 %v26, 4294901760
    %497 = vmatmul.mubr.f32.gmra.mrb[0].mxu0 %v496
    %v498 = vpop.f32.mrb[0].mxu0
    %v499 = vadd.f32 %v238, %v498
    %v500 = vpop.f32.mrb[0].mxu0
    %501 = vmatprep.mubr.f32.mxu0 0.0
    %v502 = vand.u32 %v27, 4294901760
    %503 = vmatmul.mubr.f32.gmra.mrb[0].mxu0 %v502
    %v504 = vpop.f32.mrb[0].mxu0
    %v505 = vadd.f32 %v248, %v504
    %v506 = vpop.f32.mrb[0].mxu0
    %507 = vmatprep.mubr.f32.mxu0 0.0
    %v508 = vand.u32 %v28, 4294901760
    %509 = vmatmul.mubr.f32.gmra.mrb[0].mxu0 %v508
    %v510 = vpop.f32.mrb[0].mxu0
    %v511 = vadd.f32 %v258, %v510
    %v512 = vpop.f32.mrb[0].mxu0
    %513 = vmatprep.mubr.f32.mxu0 0.0
    %v514 = vand.u32 %v29, 4294901760
    %515 = vmatmul.mubr.f32.gmra.mrb[0].mxu0 %v514
    %v516 = vpop.f32.mrb[0].mxu0
    %v517 = vadd.f32 %v268, %v516
    %v518 = vpop.f32.mrb[0].mxu0
    %519 = vmatprep.mubr.f32.mxu0 0.0
    %v520 = vand.u32 %v30, 4294901760
    %521 = vmatmul.mubr.f32.gmra.mrb[0].mxu0 %v520
    %v522 = vpop.f32.mrb[0].mxu0
    %v523 = vadd.f32 %v278, %v522
    %v524 = vpop.f32.mrb[0].mxu0
    %525 = vmatprep.mubr.f32.mxu0 0.0
    %v526 = vand.u32 %v31, 4294901760
    %527 = vmatmul.mubr.f32.gmra.mrb[0].mxu0 %v526
    %v528 = vpop.f32.mrb[0].mxu0
    %v529 = vadd.f32 %v288, %v528
    %v530 = vpop.f32.mrb[0].mxu0
    %531 = vdwg.mxu0
    %532 = vmatprep.subr.mxu0 0.0
    %v533 = vand.u32 %v32, 4294901760
    %v534 = vsub.f32 %v32, %v533
    %535 = vmatpush1.msra.mxu0 %v534
    %536 = vmatprep.subr.mxu0 0.0
    %v537 = vand.u32 %v33, 4294901760
    %v538 = vsub.f32 %v33, %v537
    %539 = vmatpush1.msra.mxu0 %v538
    %540 = vmatprep.subr.mxu0 0.0
    %v541 = vand.u32 %v34, 4294901760
    %v542 = vsub.f32 %v34, %v541
    %543 = vmatpush1.msra.mxu0 %v542
    %544 = vmatprep.subr.mxu0 0.0
    %v545 = vand.u32 %v35, 4294901760
    %v546 = vsub.f32 %v35, %v545
    %547 = vmatpush1.msra.mxu0 %v546
    %548 = vmatprep.subr.mxu0 0.0
    %v549 = vand.u32 %v36, 4294901760
    %v550 = vsub.f32 %v36, %v549
    %551 = vmatpush1.msra.mxu0 %v550
    %552 = vmatprep.subr.mxu0 0.0
    %v553 = vand.u32 %v37, 4294901760
    %v554 = vsub.f32 %v37, %v553
    %555 = vmatpush1.msra.mxu0 %v554
    %556 = vmatprep.subr.mxu0 0.0
    %v557 = vand.u32 %v38, 4294901760
    %v558 = vsub.f32 %v38, %v557
    %559 = vmatpush1.msra.mxu0 %v558
    %560 = vmatprep.subr.mxu0 0.0
    %v561 = vand.u32 %v39, 4294901760
    %v562 = vsub.f32 %v39, %v561
    %563 = vmatpush1.msra.mxu0 %v562
    %564 = vmatprep.subr.mxu0 0.0
    %v565 = vand.u32 %v40, 4294901760
    %v566 = vsub.f32 %v40, %v565
    %567 = vmatpush1.msra.mxu0 %v566
    %568 = vmatprep.subr.mxu0 0.0
    %v569 = vand.u32 %v41, 4294901760
    %v570 = vsub.f32 %v41, %v569
    %571 = vmatpush1.msra.mxu0 %v570
    %572 = vmatprep.subr.mxu0 0.0
    %v573 = vand.u32 %v42, 4294901760
    %v574 = vsub.f32 %v42, %v573
    %575 = vmatpush1.msra.mxu0 %v574
    %576 = vmatprep.subr.mxu0 0.0
    %v577 = vand.u32 %v43, 4294901760
    %v578 = vsub.f32 %v43, %v577
    %579 = vmatpush1.msra.mxu0 %v578
    %580 = vmatprep.subr.mxu0 0.0
    %v581 = vand.u32 %v44, 4294901760
    %v582 = vsub.f32 %v44, %v581
    %583 = vmatpush1.msra.mxu0 %v582
    %584 = vmatprep.subr.mxu0 0.0
    %v585 = vand.u32 %v45, 4294901760
    %v586 = vsub.f32 %v45, %v585
    %587 = vmatpush1.msra.mxu0 %v586
    %588 = vmatprep.subr.mxu0 0.0
    %v589 = vand.u32 %v46, 4294901760
    %v590 = vsub.f32 %v46, %v589
    %591 = vmatpush1.msra.mxu0 %v590
    %592 = vmatprep.subr.mxu0 0.0
    %v593 = vand.u32 %v47, 4294901760
    %v594 = vsub.f32 %v47, %v593
    %595 = vmatpush1.msra.mxu0 %v594
    %596 = vmatprep.subr.mxu0 0.0
    %597 = vmatpush1.msra.mxu0 0.0
    %598 = vmatprep.subr.mxu0 0.0
    %599 = vmatpush1.msra.mxu0 0.0
    %600 = vmatprep.subr.mxu0 0.0
    %601 = vmatpush1.msra.mxu0 0.0
    %602 = vmatprep.subr.mxu0 0.0
    %603 = vmatpush1.msra.mxu0 0.0
    %604 = vmatprep.subr.mxu0 0.0
    %605 = vmatpush1.msra.mxu0 0.0
    %606 = vmatprep.subr.mxu0 0.0
    %607 = vmatpush1.msra.mxu0 0.0
    %608 = vmatprep.subr.mxu0 0.0
    %609 = vmatpush1.msra.mxu0 0.0
    %610 = vmatprep.subr.mxu0 0.0
    %611 = vmatpush1.msra.mxu0 0.0
    %612 = vmatprep.subr.mxu0 0.0
    %613 = vmatpush1.msra.mxu0 0.0
    %614 = vmatprep.subr.mxu0 0.0
    %615 = vmatpush1.msra.mxu0 0.0
    %616 = vmatprep.subr.mxu0 0.0
    %617 = vmatpush1.msra.mxu0 0.0
    %618 = vmatprep.subr.mxu0 0.0
    %619 = vmatpush1.msra.mxu0 0.0
    %620 = vmatprep.subr.mxu0 0.0
    %621 = vmatpush1.msra.mxu0 0.0
    %622 = vmatprep.subr.mxu0 0.0
    %623 = vmatpush1.msra.mxu0 0.0
    %624 = vmatprep.subr.mxu0 0.0
    %625 = vmatpush1.msra.mxu0 0.0
    %626 = vmatprep.subr.mxu0 0.0
    %627 = vmatpush1.msra.mxu0 0.0
    %628 = vmatprep.mubr.f32.mxu0 0.0
    %v629 = vand.u32 %v16, 4294901760
    %v630 = vsub.f32 %v16, %v629
    %631 = vmatmul.mubr.f32.gmra.mrb[0].mxu0 %v630
    %v632 = vpop.f32.mrb[0].mxu0
    %v633 = vadd.f32 %v439, %v632
    %v634 = vpop.f32.mrb[0].mxu0
    %635 = vmatprep.mubr.f32.mxu0 0.0
    %v636 = vand.u32 %v17, 4294901760
    %v637 = vsub.f32 %v17, %v636
    %638 = vmatmul.mubr.f32.gmra.mrb[0].mxu0 %v637
    %v639 = vpop.f32.mrb[0].mxu0
    %v640 = vadd.f32 %v445, %v639
    %v641 = vpop.f32.mrb[0].mxu0
    %642 = vmatprep.mubr.f32.mxu0 0.0
    %v643 = vand.u32 %v18, 4294901760
    %v644 = vsub.f32 %v18, %v643
    %645 = vmatmul.mubr.f32.gmra.mrb[0].mxu0 %v644
    %v646 = vpop.f32.mrb[0].mxu0
    %v647 = vadd.f32 %v451, %v646
    %v648 = vpop.f32.mrb[0].mxu0
    %649 = vmatprep.mubr.f32.mxu0 0.0
    %v650 = vand.u32 %v19, 4294901760
    %v651 = vsub.f32 %v19, %v650
    %652 = vmatmul.mubr.f32.gmra.mrb[0].mxu0 %v651
    %v653 = vpop.f32.mrb[0].mxu0
    %v654 = vadd.f32 %v457, %v653
    %v655 = vpop.f32.mrb[0].mxu0
    %656 = vmatprep.mubr.f32.mxu0 0.0
    %v657 = vand.u32 %v20, 4294901760
    %v658 = vsub.f32 %v20, %v657
    %659 = vmatmul.mubr.f32.gmra.mrb[0].mxu0 %v658
    %v660 = vpop.f32.mrb[0].mxu0
    %v661 = vadd.f32 %v463, %v660
    %v662 = vpop.f32.mrb[0].mxu0
    %663 = vmatprep.mubr.f32.mxu0 0.0
    %v664 = vand.u32 %v21, 4294901760
    %v665 = vsub.f32 %v21, %v664
    %666 = vmatmul.mubr.f32.gmra.mrb[0].mxu0 %v665
    %v667 = vpop.f32.mrb[0].mxu0
    %v668 = vadd.f32 %v469, %v667
    %v669 = vpop.f32.mrb[0].mxu0
    %670 = vmatprep.mubr.f32.mxu0 0.0
    %v671 = vand.u32 %v22, 4294901760
    %v672 = vsub.f32 %v22, %v671
    %673 = vmatmul.mubr.f32.gmra.mrb[0].mxu0 %v672
    %v674 = vpop.f32.mrb[0].mxu0
    %v675 = vadd.f32 %v475, %v674
    %v676 = vpop.f32.mrb[0].mxu0
    %677 = vmatprep.mubr.f32.mxu0 0.0
    %v678 = vand.u32 %v23, 4294901760
    %v679 = vsub.f32 %v23, %v678
    %680 = vmatmul.mubr.f32.gmra.mrb[0].mxu0 %v679
    %v681 = vpop.f32.mrb[0].mxu0
    %v682 = vadd.f32 %v481, %v681
    %v683 = vpop.f32.mrb[0].mxu0
    %684 = vmatprep.mubr.f32.mxu0 0.0
    %v685 = vand.u32 %v24, 4294901760
    %v686 = vsub.f32 %v24, %v685
    %687 = vmatmul.mubr.f32.gmra.mrb[0].mxu0 %v686
    %v688 = vpop.f32.mrb[0].mxu0
    %v689 = vadd.f32 %v487, %v688
    %v690 = vpop.f32.mrb[0].mxu0
    %691 = vmatprep.mubr.f32.mxu0 0.0
    %v692 = vand.u32 %v25, 4294901760
    %v693 = vsub.f32 %v25, %v692
    %694 = vmatmul.mubr.f32.gmra.mrb[0].mxu0 %v693
    %v695 = vpop.f32.mrb[0].mxu0
    %v696 = vadd.f32 %v493, %v695
    %v697 = vpop.f32.mrb[0].mxu0
    %698 = vmatprep.mubr.f32.mxu0 0.0
    %v699 = vand.u32 %v26, 4294901760
    %v700 = vsub.f32 %v26, %v699
    %701 = vmatmul.mubr.f32.gmra.mrb[0].mxu0 %v700
    %v702 = vpop.f32.mrb[0].mxu0
    %v703 = vadd.f32 %v499, %v702
    %v704 = vpop.f32.mrb[0].mxu0
    %705 = vmatprep.mubr.f32.mxu0 0.0
    %v706 = vand.u32 %v27, 4294901760
    %v707 = vsub.f32 %v27, %v706
    %708 = vmatmul.mubr.f32.gmra.mrb[0].mxu0 %v707
    %v709 = vpop.f32.mrb[0].mxu0
    %v710 = vadd.f32 %v505, %v709
    %v711 = vpop.f32.mrb[0].mxu0
    %712 = vmatprep.mubr.f32.mxu0 0.0
    %v713 = vand.u32 %v28, 4294901760
    %v714 = vsub.f32 %v28, %v713
    %715 = vmatmul.mubr.f32.gmra.mrb[0].mxu0 %v714
    %v716 = vpop.f32.mrb[0].mxu0
    %v717 = vadd.f32 %v511, %v716
    %v718 = vpop.f32.mrb[0].mxu0
    %719 = vmatprep.mubr.f32.mxu0 0.0
    %v720 = vand.u32 %v29, 4294901760
    %v721 = vsub.f32 %v29, %v720
    %722 = vmatmul.mubr.f32.gmra.mrb[0].mxu0 %v721
    %v723 = vpop.f32.mrb[0].mxu0
    %v724 = vadd.f32 %v517, %v723
    %v725 = vpop.f32.mrb[0].mxu0
    %726 = vmatprep.mubr.f32.mxu0 0.0
    %v727 = vand.u32 %v30, 4294901760
    %v728 = vsub.f32 %v30, %v727
    %729 = vmatmul.mubr.f32.gmra.mrb[0].mxu0 %v728
    %v730 = vpop.f32.mrb[0].mxu0
    %v731 = vadd.f32 %v523, %v730
    %v732 = vpop.f32.mrb[0].mxu0
    %733 = vmatprep.mubr.f32.mxu0 0.0
    %v734 = vand.u32 %v31, 4294901760
    %v735 = vsub.f32 %v31, %v734
    %736 = vmatmul.mubr.f32.gmra.mrb[0].mxu0 %v735
    %v737 = vpop.f32.mrb[0].mxu0
    %v738 = vadd.f32 %v529, %v737
    %v739 = vpop.f32.mrb[0].mxu0
    %740 = vdwg.mxu0
    %741 = vmatprep.subr.mxu0 0.0
    %v742 = vand.u32 %v32, 4294901760
    %743 = vmatpush1.msra.mxu0 %v742
    %744 = vmatprep.subr.mxu0 0.0
    %v745 = vand.u32 %v33, 4294901760
    %746 = vmatpush1.msra.mxu0 %v745
    %747 = vmatprep.subr.mxu0 0.0
    %v748 = vand.u32 %v34, 4294901760
    %749 = vmatpush1.msra.mxu0 %v748
    %750 = vmatprep.subr.mxu0 0.0
    %v751 = vand.u32 %v35, 4294901760
    %752 = vmatpush1.msra.mxu0 %v751
    %753 = vmatprep.subr.mxu0 0.0
    %v754 = vand.u32 %v36, 4294901760
    %755 = vmatpush1.msra.mxu0 %v754
    %756 = vmatprep.subr.mxu0 0.0
    %v757 = vand.u32 %v37, 4294901760
    %758 = vmatpush1.msra.mxu0 %v757
    %759 = vmatprep.subr.mxu0 0.0
    %v760 = vand.u32 %v38, 4294901760
    %761 = vmatpush1.msra.mxu0 %v760
    %762 = vmatprep.subr.mxu0 0.0
    %v763 = vand.u32 %v39, 4294901760
    %764 = vmatpush1.msra.mxu0 %v763
    %765 = vmatprep.subr.mxu0 0.0
    %v766 = vand.u32 %v40, 4294901760
    %767 = vmatpush1.msra.mxu0 %v766
    %768 = vmatprep.subr.mxu0 0.0
    %v769 = vand.u32 %v41, 4294901760
    %770 = vmatpush1.msra.mxu0 %v769
    %771 = vmatprep.subr.mxu0 0.0
    %v772 = vand.u32 %v42, 4294901760
    %773 = vmatpush1.msra.mxu0 %v772
    %774 = vmatprep.subr.mxu0 0.0
    %v775 = vand.u32 %v43, 4294901760
    %776 = vmatpush1.msra.mxu0 %v775
    %777 = vmatprep.subr.mxu0 0.0
    %v778 = vand.u32 %v44, 4294901760
    %779 = vmatpush1.msra.mxu0 %v778
    %780 = vmatprep.subr.mxu0 0.0
    %v781 = vand.u32 %v45, 4294901760
    %782 = vmatpush1.msra.mxu0 %v781
    %783 = vmatprep.subr.mxu0 0.0
    %v784 = vand.u32 %v46, 4294901760
    %785 = vmatpush1.msra.mxu0 %v784
    %786 = vmatprep.subr.mxu0 0.0
    %v787 = vand.u32 %v47, 4294901760
    %788 = vmatpush1.msra.mxu0 %v787
    %789 = vmatprep.subr.mxu0 0.0
    %790 = vmatpush1.msra.mxu0 0.0
    %791 = vmatprep.subr.mxu0 0.0
    %792 = vmatpush1.msra.mxu0 0.0
    %793 = vmatprep.subr.mxu0 0.0
    %794 = vmatpush1.msra.mxu0 0.0
    %795 = vmatprep.subr.mxu0 0.0
    %796 = vmatpush1.msra.mxu0 0.0
    %797 = vmatprep.subr.mxu0 0.0
    %798 = vmatpush1.msra.mxu0 0.0
    %799 = vmatprep.subr.mxu0 0.0
    %800 = vmatpush1.msra.mxu0 0.0
    %801 = vmatprep.subr.mxu0 0.0
    %802 = vmatpush1.msra.mxu0 0.0
    %803 = vmatprep.subr.mxu0 0.0
    %804 = vmatpush1.msra.mxu0 0.0
    %805 = vmatprep.subr.mxu0 0.0
    %806 = vmatpush1.msra.mxu0 0.0
    %807 = vmatprep.subr.mxu0 0.0
    %808 = vmatpush1.msra.mxu0 0.0
    %809 = vmatprep.subr.mxu0 0.0
    %810 = vmatpush1.msra.mxu0 0.0
    %811 = vmatprep.subr.mxu0 0.0
    %812 = vmatpush1.msra.mxu0 0.0
    %813 = vmatprep.subr.mxu0 0.0
    %814 = vmatpush1.msra.mxu0 0.0
    %815 = vmatprep.subr.mxu0 0.0
    %816 = vmatpush1.msra.mxu0 0.0
    %817 = vmatprep.subr.mxu0 0.0
    %818 = vmatpush1.msra.mxu0 0.0
    %819 = vmatprep.subr.mxu0 0.0
    %820 = vmatpush1.msra.mxu0 0.0
    %821 = vmatprep.mubr.f32.mxu0 0.0
    %v822 = vand.u32 %v16, 4294901760
    %v823 = vsub.f32 %v16, %v822
    %v824 = vand.u32 %v823, 4294901760
    %825 = vmatmul.mubr.f32.gmra.mrb[0].mxu0 %v824
    %v826 = vpop.f32.mrb[0].mxu0
    %v827 = vadd.f32 %v633, %v826
    %v828 = vpop.f32.mrb[0].mxu0
    %829 = vmatprep.mubr.f32.mxu0 0.0
    %v830 = vand.u32 %v17, 4294901760
    %v831 = vsub.f32 %v17, %v830
    %v832 = vand.u32 %v831, 4294901760
    %833 = vmatmul.mubr.f32.gmra.mrb[0].mxu0 %v832
    %v834 = vpop.f32.mrb[0].mxu0
    %v835 = vadd.f32 %v640, %v834
    %v836 = vpop.f32.mrb[0].mxu0
    %837 = vmatprep.mubr.f32.mxu0 0.0
    %v838 = vand.u32 %v18, 4294901760
    %v839 = vsub.f32 %v18, %v838
    %v840 = vand.u32 %v839, 4294901760
    %841 = vmatmul.mubr.f32.gmra.mrb[0].mxu0 %v840
    %v842 = vpop.f32.mrb[0].mxu0
    %v843 = vadd.f32 %v647, %v842
    %v844 = vpop.f32.mrb[0].mxu0
    %845 = vmatprep.mubr.f32.mxu0 0.0
    %v846 = vand.u32 %v19, 4294901760
    %v847 = vsub.f32 %v19, %v846
    %v848 = vand.u32 %v847, 4294901760
    %849 = vmatmul.mubr.f32.gmra.mrb[0].mxu0 %v848
    %v850 = vpop.f32.mrb[0].mxu0
    %v851 = vadd.f32 %v654, %v850
    %v852 = vpop.f32.mrb[0].mxu0
    %853 = vmatprep.mubr.f32.mxu0 0.0
    %v854 = vand.u32 %v20, 4294901760
    %v855 = vsub.f32 %v20, %v854
    %v856 = vand.u32 %v855, 4294901760
    %857 = vmatmul.mubr.f32.gmra.mrb[0].mxu0 %v856
    %v858 = vpop.f32.mrb[0].mxu0
    %v859 = vadd.f32 %v661, %v858
    %v860 = vpop.f32.mrb[0].mxu0
    %861 = vmatprep.mubr.f32.mxu0 0.0
    %v862 = vand.u32 %v21, 4294901760
    %v863 = vsub.f32 %v21, %v862
    %v864 = vand.u32 %v863, 4294901760
    %865 = vmatmul.mubr.f32.gmra.mrb[0].mxu0 %v864
    %v866 = vpop.f32.mrb[0].mxu0
    %v867 = vadd.f32 %v668, %v866
    %v868 = vpop.f32.mrb[0].mxu0
    %869 = vmatprep.mubr.f32.mxu0 0.0
    %v870 = vand.u32 %v22, 4294901760
    %v871 = vsub.f32 %v22, %v870
    %v872 = vand.u32 %v871, 4294901760
    %873 = vmatmul.mubr.f32.gmra.mrb[0].mxu0 %v872
    %v874 = vpop.f32.mrb[0].mxu0
    %v875 = vadd.f32 %v675, %v874
    %v876 = vpop.f32.mrb[0].mxu0
    %877 = vmatprep.mubr.f32.mxu0 0.0
    %v878 = vand.u32 %v23, 4294901760
    %v879 = vsub.f32 %v23, %v878
    %v880 = vand.u32 %v879, 4294901760
    %881 = vmatmul.mubr.f32.gmra.mrb[0].mxu0 %v880
    %v882 = vpop.f32.mrb[0].mxu0
    %v883 = vadd.f32 %v682, %v882
    %v884 = vpop.f32.mrb[0].mxu0
    %885 = vmatprep.mubr.f32.mxu0 0.0
    %v886 = vand.u32 %v24, 4294901760
    %v887 = vsub.f32 %v24, %v886
    %v888 = vand.u32 %v887, 4294901760
    %889 = vmatmul.mubr.f32.gmra.mrb[0].mxu0 %v888
    %v890 = vpop.f32.mrb[0].mxu0
    %v891 = vadd.f32 %v689, %v890
    %v892 = vpop.f32.mrb[0].mxu0
    %893 = vmatprep.mubr.f32.mxu0 0.0
    %v894 = vand.u32 %v25, 4294901760
    %v895 = vsub.f32 %v25, %v894
    %v896 = vand.u32 %v895, 4294901760
    %897 = vmatmul.mubr.f32.gmra.mrb[0].mxu0 %v896
    %v898 = vpop.f32.mrb[0].mxu0
    %v899 = vadd.f32 %v696, %v898
    %v900 = vpop.f32.mrb[0].mxu0
    %901 = vmatprep.mubr.f32.mxu0 0.0
    %v902 = vand.u32 %v26, 4294901760
    %v903 = vsub.f32 %v26, %v902
    %v904 = vand.u32 %v903, 4294901760
    %905 = vmatmul.mubr.f32.gmra.mrb[0].mxu0 %v904
    %v906 = vpop.f32.mrb[0].mxu0
    %v907 = vadd.f32 %v703, %v906
    %v908 = vpop.f32.mrb[0].mxu0
    %909 = vmatprep.mubr.f32.mxu0 0.0
    %v910 = vand.u32 %v27, 4294901760
    %v911 = vsub.f32 %v27, %v910
    %v912 = vand.u32 %v911, 4294901760
    %913 = vmatmul.mubr.f32.gmra.mrb[0].mxu0 %v912
    %v914 = vpop.f32.mrb[0].mxu0
    %v915 = vadd.f32 %v710, %v914
    %v916 = vpop.f32.mrb[0].mxu0
    %917 = vmatprep.mubr.f32.mxu0 0.0
    %v918 = vand.u32 %v28, 4294901760
    %v919 = vsub.f32 %v28, %v918
    %v920 = vand.u32 %v919, 4294901760
    %921 = vmatmul.mubr.f32.gmra.mrb[0].mxu0 %v920
    %v922 = vpop.f32.mrb[0].mxu0
    %v923 = vadd.f32 %v717, %v922
    %v924 = vpop.f32.mrb[0].mxu0
    %925 = vmatprep.mubr.f32.mxu0 0.0
    %v926 = vand.u32 %v29, 4294901760
    %v927 = vsub.f32 %v29, %v926
    %v928 = vand.u32 %v927, 4294901760
    %929 = vmatmul.mubr.f32.gmra.mrb[0].mxu0 %v928
    %v930 = vpop.f32.mrb[0].mxu0
    %v931 = vadd.f32 %v724, %v930
    %v932 = vpop.f32.mrb[0].mxu0
    %933 = vmatprep.mubr.f32.mxu0 0.0
    %v934 = vand.u32 %v30, 4294901760
    %v935 = vsub.f32 %v30, %v934
    %v936 = vand.u32 %v935, 4294901760
    %937 = vmatmul.mubr.f32.gmra.mrb[0].mxu0 %v936
    %v938 = vpop.f32.mrb[0].mxu0
    %v939 = vadd.f32 %v731, %v938
    %v940 = vpop.f32.mrb[0].mxu0
    %941 = vmatprep.mubr.f32.mxu0 0.0
    %v942 = vand.u32 %v31, 4294901760
    %v943 = vsub.f32 %v31, %v942
    %v944 = vand.u32 %v943, 4294901760
    %945 = vmatmul.mubr.f32.gmra.mrb[0].mxu0 %v944
    %v946 = vpop.f32.mrb[0].mxu0
    %v947 = vadd.f32 %v738, %v946
    %v948 = vpop.f32.mrb[0].mxu0
    %949 = vdwg.mxu0
    %950 = vmatprep.subr.mxu0 0.0
    %v951 = vand.u32 %v32, 4294901760
    %v952 = vsub.f32 %v32, %v951
    %v953 = vand.u32 %v952, 4294901760
    %954 = vmatpush1.msra.mxu0 %v953
    %955 = vmatprep.subr.mxu0 0.0
    %v956 = vand.u32 %v33, 4294901760
    %v957 = vsub.f32 %v33, %v956
    %v958 = vand.u32 %v957, 4294901760
    %959 = vmatpush1.msra.mxu0 %v958
    %960 = vmatprep.subr.mxu0 0.0
    %v961 = vand.u32 %v34, 4294901760
    %v962 = vsub.f32 %v34, %v961
    %v963 = vand.u32 %v962, 4294901760
    %964 = vmatpush1.msra.mxu0 %v963
    %965 = vmatprep.subr.mxu0 0.0
    %v966 = vand.u32 %v35, 4294901760
    %v967 = vsub.f32 %v35, %v966
    %v968 = vand.u32 %v967, 4294901760
    %969 = vmatpush1.msra.mxu0 %v968
    %970 = vmatprep.subr.mxu0 0.0
    %v971 = vand.u32 %v36, 4294901760
    %v972 = vsub.f32 %v36, %v971
    %v973 = vand.u32 %v972, 4294901760
    %974 = vmatpush1.msra.mxu0 %v973
    %975 = vmatprep.subr.mxu0 0.0
    %v976 = vand.u32 %v37, 4294901760
    %v977 = vsub.f32 %v37, %v976
    %v978 = vand.u32 %v977, 4294901760
    %979 = vmatpush1.msra.mxu0 %v978
    %980 = vmatprep.subr.mxu0 0.0
    %v981 = vand.u32 %v38, 4294901760
    %v982 = vsub.f32 %v38, %v981
    %v983 = vand.u32 %v982, 4294901760
    %984 = vmatpush1.msra.mxu0 %v983
    %985 = vmatprep.subr.mxu0 0.0
    %v986 = vand.u32 %v39, 4294901760
    %v987 = vsub.f32 %v39, %v986
    %v988 = vand.u32 %v987, 4294901760
    %989 = vmatpush1.msra.mxu0 %v988
    %990 = vmatprep.subr.mxu0 0.0
    %v991 = vand.u32 %v40, 4294901760
    %v992 = vsub.f32 %v40, %v991
    %v993 = vand.u32 %v992, 4294901760
    %994 = vmatpush1.msra.mxu0 %v993
    %995 = vmatprep.subr.mxu0 0.0
    %v996 = vand.u32 %v41, 4294901760
    %v997 = vsub.f32 %v41, %v996
    %v998 = vand.u32 %v997, 4294901760
    %999 = vmatpush1.msra.mxu0 %v998
    %1000 = vmatprep.subr.mxu0 0.0
    %v1001 = vand.u32 %v42, 4294901760
    %v1002 = vsub.f32 %v42, %v1001
    %v1003 = vand.u32 %v1002, 4294901760
    %1004 = vmatpush1.msra.mxu0 %v1003
    %1005 = vmatprep.subr.mxu0 0.0
    %v1006 = vand.u32 %v43, 4294901760
    %v1007 = vsub.f32 %v43, %v1006
    %v1008 = vand.u32 %v1007, 4294901760
    %1009 = vmatpush1.msra.mxu0 %v1008
    %1010 = vmatprep.subr.mxu0 0.0
    %v1011 = vand.u32 %v44, 4294901760
    %v1012 = vsub.f32 %v44, %v1011
    %v1013 = vand.u32 %v1012, 4294901760
    %1014 = vmatpush1.msra.mxu0 %v1013
    %1015 = vmatprep.subr.mxu0 0.0
    %v1016 = vand.u32 %v45, 4294901760
    %v1017 = vsub.f32 %v45, %v1016
    %v1018 = vand.u32 %v1017, 4294901760
    %1019 = vmatpush1.msra.mxu0 %v1018
    %1020 = vmatprep.subr.mxu0 0.0
    %v1021 = vand.u32 %v46, 4294901760
    %v1022 = vsub.f32 %v46, %v1021
    %v1023 = vand.u32 %v1022, 4294901760
    %1024 = vmatpush1.msra.mxu0 %v1023
    %1025 = vmatprep.subr.mxu0 0.0
    %v1026 = vand.u32 %v47, 4294901760
    %v1027 = vsub.f32 %v47, %v1026
    %v1028 = vand.u32 %v1027, 4294901760
    %1029 = vmatpush1.msra.mxu0 %v1028
    %1030 = vmatprep.subr.mxu0 0.0
    %1031 = vmatpush1.msra.mxu0 0.0
    %1032 = vmatprep.subr.mxu0 0.0
    %1033 = vmatpush1.msra.mxu0 0.0
    %1034 = vmatprep.subr.mxu0 0.0
    %1035 = vmatpush1.msra.mxu0 0.0
    %1036 = vmatprep.subr.mxu0 0.0
    %1037 = vmatpush1.msra.mxu0 0.0
    %1038 = vmatprep.subr.mxu0 0.0
    %1039 = vmatpush1.msra.mxu0 0.0
    %1040 = vmatprep.subr.mxu0 0.0
    %1041 = vmatpush1.msra.mxu0 0.0
    %1042 = vmatprep.subr.mxu0 0.0
    %1043 = vmatpush1.msra.mxu0 0.0
    %1044 = vmatprep.subr.mxu0 0.0
    %1045 = vmatpush1.msra.mxu0 0.0
    %1046 = vmatprep.subr.mxu0 0.0
    %1047 = vmatpush1.msra.mxu0 0.0
    %1048 = vmatprep.subr.mxu0 0.0
    %1049 = vmatpush1.msra.mxu0 0.0
    %1050 = vmatprep.subr.mxu0 0.0
    %1051 = vmatpush1.msra.mxu0 0.0
    %1052 = vmatprep.subr.mxu0 0.0
    %1053 = vmatpush1.msra.mxu0 0.0
    %1054 = vmatprep.subr.mxu0 0.0
    %1055 = vmatpush1.msra.mxu0 0.0
    %1056 = vmatprep.subr.mxu0 0.0
    %1057 = vmatpush1.msra.mxu0 0.0
    %1058 = vmatprep.subr.mxu0 0.0
    %1059 = vmatpush1.msra.mxu0 0.0
    %1060 = vmatprep.subr.mxu0 0.0
    %1061 = vmatpush1.msra.mxu0 0.0
    %1062 = vmatprep.mubr.f32.mxu0 0.0
    %v1063 = vand.u32 %v16, 4294901760
    %1064 = vmatmul.mubr.f32.gmra.mrb[0].mxu0 %v1063
    %v1065 = vpop.f32.mrb[0].mxu0
    %v1066 = vadd.f32 %v827, %v1065
    %v1067 = vpop.f32.mrb[0].mxu0
    %1068 = vmatprep.mubr.f32.mxu0 0.0
    %v1069 = vand.u32 %v17, 4294901760
    %1070 = vmatmul.mubr.f32.gmra.mrb[0].mxu0 %v1069
    %v1071 = vpop.f32.mrb[0].mxu0
    %v1072 = vadd.f32 %v835, %v1071
    %v1073 = vpop.f32.mrb[0].mxu0
    %1074 = vmatprep.mubr.f32.mxu0 0.0
    %v1075 = vand.u32 %v18, 4294901760
    %1076 = vmatmul.mubr.f32.gmra.mrb[0].mxu0 %v1075
    %v1077 = vpop.f32.mrb[0].mxu0
    %v1078 = vadd.f32 %v843, %v1077
    %v1079 = vpop.f32.mrb[0].mxu0
    %1080 = vmatprep.mubr.f32.mxu0 0.0
    %v1081 = vand.u32 %v19, 4294901760
    %1082 = vmatmul.mubr.f32.gmra.mrb[0].mxu0 %v1081
    %v1083 = vpop.f32.mrb[0].mxu0
    %v1084 = vadd.f32 %v851, %v1083
    %v1085 = vpop.f32.mrb[0].mxu0
    %1086 = vmatprep.mubr.f32.mxu0 0.0
    %v1087 = vand.u32 %v20, 4294901760
    %1088 = vmatmul.mubr.f32.gmra.mrb[0].mxu0 %v1087
    %v1089 = vpop.f32.mrb[0].mxu0
    %v1090 = vadd.f32 %v859, %v1089
    %v1091 = vpop.f32.mrb[0].mxu0
    %1092 = vmatprep.mubr.f32.mxu0 0.0
    %v1093 = vand.u32 %v21, 4294901760
    %1094 = vmatmul.mubr.f32.gmra.mrb[0].mxu0 %v1093
    %v1095 = vpop.f32.mrb[0].mxu0
    %v1096 = vadd.f32 %v867, %v1095
    %v1097 = vpop.f32.mrb[0].mxu0
    %1098 = vmatprep.mubr.f32.mxu0 0.0
    %v1099 = vand.u32 %v22, 4294901760
    %1100 = vmatmul.mubr.f32.gmra.mrb[0].mxu0 %v1099
    %v1101 = vpop.f32.mrb[0].mxu0
    %v1102 = vadd.f32 %v875, %v1101
    %v1103 = vpop.f32.mrb[0].mxu0
    %1104 = vmatprep.mubr.f32.mxu0 0.0
    %v1105 = vand.u32 %v23, 4294901760
    %1106 = vmatmul.mubr.f32.gmra.mrb[0].mxu0 %v1105
    %v1107 = vpop.f32.mrb[0].mxu0
    %v1108 = vadd.f32 %v883, %v1107
    %v1109 = vpop.f32.mrb[0].mxu0
    %1110 = vmatprep.mubr.f32.mxu0 0.0
    %v1111 = vand.u32 %v24, 4294901760
    %1112 = vmatmul.mubr.f32.gmra.mrb[0].mxu0 %v1111
    %v1113 = vpop.f32.mrb[0].mxu0
    %v1114 = vadd.f32 %v891, %v1113
    %v1115 = vpop.f32.mrb[0].mxu0
    %1116 = vmatprep.mubr.f32.mxu0 0.0
    %v1117 = vand.u32 %v25, 4294901760
    %1118 = vmatmul.mubr.f32.gmra.mrb[0].mxu0 %v1117
    %v1119 = vpop.f32.mrb[0].mxu0
    %v1120 = vadd.f32 %v899, %v1119
    %v1121 = vpop.f32.mrb[0].mxu0
    %1122 = vmatprep.mubr.f32.mxu0 0.0
    %v1123 = vand.u32 %v26, 4294901760
    %1124 = vmatmul.mubr.f32.gmra.mrb[0].mxu0 %v1123
    %v1125 = vpop.f32.mrb[0].mxu0
    %v1126 = vadd.f32 %v907, %v1125
    %v1127 = vpop.f32.mrb[0].mxu0
    %1128 = vmatprep.mubr.f32.mxu0 0.0
    %v1129 = vand.u32 %v27, 4294901760
    %1130 = vmatmul.mubr.f32.gmra.mrb[0].mxu0 %v1129
    %v1131 = vpop.f32.mrb[0].mxu0
    %v1132 = vadd.f32 %v915, %v1131
    %v1133 = vpop.f32.mrb[0].mxu0
    %1134 = vmatprep.mubr.f32.mxu0 0.0
    %v1135 = vand.u32 %v28, 4294901760
    %1136 = vmatmul.mubr.f32.gmra.mrb[0].mxu0 %v1135
    %v1137 = vpop.f32.mrb[0].mxu0
    %v1138 = vadd.f32 %v923, %v1137
    %v1139 = vpop.f32.mrb[0].mxu0
    %1140 = vmatprep.mubr.f32.mxu0 0.0
    %v1141 = vand.u32 %v29, 4294901760
    %1142 = vmatmul.mubr.f32.gmra.mrb[0].mxu0 %v1141
    %v1143 = vpop.f32.mrb[0].mxu0
    %v1144 = vadd.f32 %v931, %v1143
    %v1145 = vpop.f32.mrb[0].mxu0
    %1146 = vmatprep.mubr.f32.mxu0 0.0
    %v1147 = vand.u32 %v30, 4294901760
    %1148 = vmatmul.mubr.f32.gmra.mrb[0].mxu0 %v1147
    %v1149 = vpop.f32.mrb[0].mxu0
    %v1150 = vadd.f32 %v939, %v1149
    %v1151 = vpop.f32.mrb[0].mxu0
    %1152 = vmatprep.mubr.f32.mxu0 0.0
    %v1153 = vand.u32 %v31, 4294901760
    %1154 = vmatmul.mubr.f32.gmra.mrb[0].mxu0 %v1153
    %v1155 = vpop.f32.mrb[0].mxu0
    %v1156 = vadd.f32 %v947, %v1155
    %v1157 = vpop.f32.mrb[0].mxu0
    %1158 = vdwg.mxu0
    %1159 = vmatprep.subr.mxu0 0.0
    %v1160 = vand.u32 %v32, 4294901760
    %1161 = vmatpush1.msra.mxu0 %v1160
    %1162 = vmatprep.subr.mxu0 0.0
    %v1163 = vand.u32 %v33, 4294901760
    %1164 = vmatpush1.msra.mxu0 %v1163
    %1165 = vmatprep.subr.mxu0 0.0
    %v1166 = vand.u32 %v34, 4294901760
    %1167 = vmatpush1.msra.mxu0 %v1166
    %1168 = vmatprep.subr.mxu0 0.0
    %v1169 = vand.u32 %v35, 4294901760
    %1170 = vmatpush1.msra.mxu0 %v1169
    %1171 = vmatprep.subr.mxu0 0.0
    %v1172 = vand.u32 %v36, 4294901760
    %1173 = vmatpush1.msra.mxu0 %v1172
    %1174 = vmatprep.subr.mxu0 0.0
    %v1175 = vand.u32 %v37, 4294901760
    %1176 = vmatpush1.msra.mxu0 %v1175
    %1177 = vmatprep.subr.mxu0 0.0
    %v1178 = vand.u32 %v38, 4294901760
    %1179 = vmatpush1.msra.mxu0 %v1178
    %1180 = vmatprep.subr.mxu0 0.0
    %v1181 = vand.u32 %v39, 4294901760
    %1182 = vmatpush1.msra.mxu0 %v1181
    %1183 = vmatprep.subr.mxu0 0.0
    %v1184 = vand.u32 %v40, 4294901760
    %1185 = vmatpush1.msra.mxu0 %v1184
    %1186 = vmatprep.subr.mxu0 0.0
    %v1187 = vand.u32 %v41, 4294901760
    %1188 = vmatpush1.msra.mxu0 %v1187
    %1189 = vmatprep.subr.mxu0 0.0
    %v1190 = vand.u32 %v42, 4294901760
    %1191 = vmatpush1.msra.mxu0 %v1190
    %1192 = vmatprep.subr.mxu0 0.0
    %v1193 = vand.u32 %v43, 4294901760
    %1194 = vmatpush1.msra.mxu0 %v1193
    %1195 = vmatprep.subr.mxu0 0.0
    %v1196 = vand.u32 %v44, 4294901760
    %1197 = vmatpush1.msra.mxu0 %v1196
    %1198 = vmatprep.subr.mxu0 0.0
    %v1199 = vand.u32 %v45, 4294901760
    %1200 = vmatpush1.msra.mxu0 %v1199
    %1201 = vmatprep.subr.mxu0 0.0
    %v1202 = vand.u32 %v46, 4294901760
    %1203 = vmatpush1.msra.mxu0 %v1202
    %1204 = vmatprep.subr.mxu0 0.0
    %v1205 = vand.u32 %v47, 4294901760
    %1206 = vmatpush1.msra.mxu0 %v1205
    %1207 = vmatprep.subr.mxu0 0.0
    %1208 = vmatpush1.msra.mxu0 0.0
    %1209 = vmatprep.subr.mxu0 0.0
    %1210 = vmatpush1.msra.mxu0 0.0
    %1211 = vmatprep.subr.mxu0 0.0
    %1212 = vmatpush1.msra.mxu0 0.0
    %1213 = vmatprep.subr.mxu0 0.0
    %1214 = vmatpush1.msra.mxu0 0.0
    %1215 = vmatprep.subr.mxu0 0.0
    %1216 = vmatpush1.msra.mxu0 0.0
    %1217 = vmatprep.subr.mxu0 0.0
    %1218 = vmatpush1.msra.mxu0 0.0
    %1219 = vmatprep.subr.mxu0 0.0
    %1220 = vmatpush1.msra.mxu0 0.0
    %1221 = vmatprep.subr.mxu0 0.0
    %1222 = vmatpush1.msra.mxu0 0.0
    %1223 = vmatprep.subr.mxu0 0.0
    %1224 = vmatpush1.msra.mxu0 0.0
    %1225 = vmatprep.subr.mxu0 0.0
    %1226 = vmatpush1.msra.mxu0 0.0
    %1227 = vmatprep.subr.mxu0 0.0
    %1228 = vmatpush1.msra.mxu0 0.0
    %1229 = vmatprep.subr.mxu0 0.0
    %1230 = vmatpush1.msra.mxu0 0.0
    %1231 = vmatprep.subr.mxu0 0.0
    %1232 = vmatpush1.msra.mxu0 0.0
    %1233 = vmatprep.subr.mxu0 0.0
    %1234 = vmatpush1.msra.mxu0 0.0
    %1235 = vmatprep.subr.mxu0 0.0
    %1236 = vmatpush1.msra.mxu0 0.0
    %1237 = vmatprep.subr.mxu0 0.0
    %1238 = vmatpush1.msra.mxu0 0.0
    %1239 = vmatprep.mubr.f32.mxu0 0.0
    %v1240 = vand.u32 %v16, 4294901760
    %1241 = vmatmul.mubr.f32.gmra.mrb[0].mxu0 %v1240
    %v1242 = vpop.f32.mrb[0].mxu0
    %v1243 = vadd.f32 %v1066, %v1242
    %v1244 = vpop.f32.mrb[0].mxu0
    %1245 = vmatprep.mubr.f32.mxu0 0.0
    %v1246 = vand.u32 %v17, 4294901760
    %1247 = vmatmul.mubr.f32.gmra.mrb[0].mxu0 %v1246
    %v1248 = vpop.f32.mrb[0].mxu0
    %v1249 = vadd.f32 %v1072, %v1248
    %v1250 = vpop.f32.mrb[0].mxu0
    %1251 = vmatprep.mubr.f32.mxu0 0.0
    %v1252 = vand.u32 %v18, 4294901760
    %1253 = vmatmul.mubr.f32.gmra.mrb[0].mxu0 %v1252
    %v1254 = vpop.f32.mrb[0].mxu0
    %v1255 = vadd.f32 %v1078, %v1254
    %v1256 = vpop.f32.mrb[0].mxu0
    %1257 = vmatprep.mubr.f32.mxu0 0.0
    %v1258 = vand.u32 %v19, 4294901760
    %1259 = vmatmul.mubr.f32.gmra.mrb[0].mxu0 %v1258
    %v1260 = vpop.f32.mrb[0].mxu0
    %v1261 = vadd.f32 %v1084, %v1260
    %v1262 = vpop.f32.mrb[0].mxu0
    %1263 = vmatprep.mubr.f32.mxu0 0.0
    %v1264 = vand.u32 %v20, 4294901760
    %1265 = vmatmul.mubr.f32.gmra.mrb[0].mxu0 %v1264
    %v1266 = vpop.f32.mrb[0].mxu0
    %v1267 = vadd.f32 %v1090, %v1266
    %v1268 = vpop.f32.mrb[0].mxu0
    %1269 = vmatprep.mubr.f32.mxu0 0.0
    %v1270 = vand.u32 %v21, 4294901760
    %1271 = vmatmul.mubr.f32.gmra.mrb[0].mxu0 %v1270
    %v1272 = vpop.f32.mrb[0].mxu0
    %v1273 = vadd.f32 %v1096, %v1272
    %v1274 = vpop.f32.mrb[0].mxu0
    %1275 = vmatprep.mubr.f32.mxu0 0.0
    %v1276 = vand.u32 %v22, 4294901760
    %1277 = vmatmul.mubr.f32.gmra.mrb[0].mxu0 %v1276
    %v1278 = vpop.f32.mrb[0].mxu0
    %v1279 = vadd.f32 %v1102, %v1278
    %v1280 = vpop.f32.mrb[0].mxu0
    %1281 = vmatprep.mubr.f32.mxu0 0.0
    %v1282 = vand.u32 %v23, 4294901760
    %1283 = vmatmul.mubr.f32.gmra.mrb[0].mxu0 %v1282
    %v1284 = vpop.f32.mrb[0].mxu0
    %v1285 = vadd.f32 %v1108, %v1284
    %v1286 = vpop.f32.mrb[0].mxu0
    %1287 = vmatprep.mubr.f32.mxu0 0.0
    %v1288 = vand.u32 %v24, 4294901760
    %1289 = vmatmul.mubr.f32.gmra.mrb[0].mxu0 %v1288
    %v1290 = vpop.f32.mrb[0].mxu0
    %v1291 = vadd.f32 %v1114, %v1290
    %v1292 = vpop.f32.mrb[0].mxu0
    %1293 = vmatprep.mubr.f32.mxu0 0.0
    %v1294 = vand.u32 %v25, 4294901760
    %1295 = vmatmul.mubr.f32.gmra.mrb[0].mxu0 %v1294
    %v1296 = vpop.f32.mrb[0].mxu0
    %v1297 = vadd.f32 %v1120, %v1296
    %v1298 = vpop.f32.mrb[0].mxu0
    %1299 = vmatprep.mubr.f32.mxu0 0.0
    %v1300 = vand.u32 %v26, 4294901760
    %1301 = vmatmul.mubr.f32.gmra.mrb[0].mxu0 %v1300
    %v1302 = vpop.f32.mrb[0].mxu0
    %v1303 = vadd.f32 %v1126, %v1302
    %v1304 = vpop.f32.mrb[0].mxu0
    %1305 = vmatprep.mubr.f32.mxu0 0.0
    %v1306 = vand.u32 %v27, 4294901760
    %1307 = vmatmul.mubr.f32.gmra.mrb[0].mxu0 %v1306
    %v1308 = vpop.f32.mrb[0].mxu0
    %v1309 = vadd.f32 %v1132, %v1308
    %v1310 = vpop.f32.mrb[0].mxu0
    %1311 = vmatprep.mubr.f32.mxu0 0.0
    %v1312 = vand.u32 %v28, 4294901760
    %1313 = vmatmul.mubr.f32.gmra.mrb[0].mxu0 %v1312
    %v1314 = vpop.f32.mrb[0].mxu0
    %v1315 = vadd.f32 %v1138, %v1314
    %v1316 = vpop.f32.mrb[0].mxu0
    %1317 = vmatprep.mubr.f32.mxu0 0.0
    %v1318 = vand.u32 %v29, 4294901760
    %1319 = vmatmul.mubr.f32.gmra.mrb[0].mxu0 %v1318
    %v1320 = vpop.f32.mrb[0].mxu0
    %v1321 = vadd.f32 %v1144, %v1320
    %v1322 = vpop.f32.mrb[0].mxu0
    %1323 = vmatprep.mubr.f32.mxu0 0.0
    %v1324 = vand.u32 %v30, 4294901760
    %1325 = vmatmul.mubr.f32.gmra.mrb[0].mxu0 %v1324
    %v1326 = vpop.f32.mrb[0].mxu0
    %v1327 = vadd.f32 %v1150, %v1326
    %v1328 = vpop.f32.mrb[0].mxu0
    %1329 = vmatprep.mubr.f32.mxu0 0.0
    %v1330 = vand.u32 %v31, 4294901760
    %1331 = vmatmul.mubr.f32.gmra.mrb[0].mxu0 %v1330
    %v1332 = vpop.f32.mrb[0].mxu0
    %v1333 = vadd.f32 %v1156, %v1332
    %v1334 = vpop.f32.mrb[0].mxu0
    %1335 = vdwg.mxu0
    %v1336 = vsub.f32 0.0, %v1243
    %v1337 = vsub.f32 0.0, %v1249
    %v1338 = vsub.f32 0.0, %v1255
    %v1339 = vsub.f32 0.0, %v1261
    %v1340 = vsub.f32 0.0, %v1267
    %v1341 = vsub.f32 0.0, %v1273
    %v1342 = vsub.f32 0.0, %v1279
    %v1343 = vsub.f32 0.0, %v1285
    %v1344 = vsub.f32 0.0, %v1291
    %v1345 = vsub.f32 0.0, %v1297
    %v1346 = vsub.f32 0.0, %v1303
    %v1347 = vsub.f32 0.0, %v1309
    %v1348 = vsub.f32 0.0, %v1315
    %v1349 = vsub.f32 0.0, %v1321
    %v1350 = vsub.f32 0.0, %v1327
    %v1351 = vsub.f32 0.0, %v1333
    %v1352 = vmul.f32 %v1336, 1.442695
    %v1353 = vpow.pop %v1352
    %v1354 = vmul.f32 %v1337, 1.442695
    %v1355 = vpow.pop %v1354
    %v1356 = vmul.f32 %v1338, 1.442695
    %v1357 = vpow.pop %v1356
    %v1358 = vmul.f32 %v1339, 1.442695
    %v1359 = vpow.pop %v1358
    %v1360 = vmul.f32 %v1340, 1.442695
    %v1361 = vpow.pop %v1360
    %v1362 = vmul.f32 %v1341, 1.442695
    %v1363 = vpow.pop %v1362
    %v1364 = vmul.f32 %v1342, 1.442695
    %v1365 = vpow.pop %v1364
    %v1366 = vmul.f32 %v1343, 1.442695
    %v1367 = vpow.pop %v1366
    %v1368 = vmul.f32 %v1344, 1.442695
    %v1369 = vpow.pop %v1368
    %v1370 = vmul.f32 %v1345, 1.442695
    %v1371 = vpow.pop %v1370
    %v1372 = vmul.f32 %v1346, 1.442695
    %v1373 = vpow.pop %v1372
    %v1374 = vmul.f32 %v1347, 1.442695
    %v1375 = vpow.pop %v1374
    %v1376 = vmul.f32 %v1348, 1.442695
    %v1377 = vpow.pop %v1376
    %v1378 = vmul.f32 %v1349, 1.442695
    %v1379 = vpow.pop %v1378
    %v1380 = vmul.f32 %v1350, 1.442695
    %v1381 = vpow.pop %v1380
    %v1382 = vmul.f32 %v1351, 1.442695
    %v1383 = vpow.pop %v1382
    %v1384 = vadd.f32 %v1353, 1.0
    %v1385 = vadd.f32 %v1355, 1.0
    %v1386 = vadd.f32 %v1357, 1.0
    %v1387 = vadd.f32 %v1359, 1.0
    %v1388 = vadd.f32 %v1361, 1.0
    %v1389 = vadd.f32 %v1363, 1.0
    %v1390 = vadd.f32 %v1365, 1.0
    %v1391 = vadd.f32 %v1367, 1.0
    %v1392 = vadd.f32 %v1369, 1.0
    %v1393 = vadd.f32 %v1371, 1.0
    %v1394 = vadd.f32 %v1373, 1.0
    %v1395 = vadd.f32 %v1375, 1.0
    %v1396 = vadd.f32 %v1377, 1.0
    %v1397 = vadd.f32 %v1379, 1.0
    %v1398 = vadd.f32 %v1381, 1.0
    %v1399 = vadd.f32 %v1383, 1.0
    %v1400 = vrcp.pop %v1384
    %v1401 = vmul.f32 1.0, %v1400
    %v1402 = vrcp.pop %v1385
    %v1403 = vmul.f32 1.0, %v1402
    %v1404 = vrcp.pop %v1386
    %v1405 = vmul.f32 1.0, %v1404
    %v1406 = vrcp.pop %v1387
    %v1407 = vmul.f32 1.0, %v1406
    %v1408 = vrcp.pop %v1388
    %v1409 = vmul.f32 1.0, %v1408
    %v1410 = vrcp.pop %v1389
    %v1411 = vmul.f32 1.0, %v1410
    %v1412 = vrcp.pop %v1390
    %v1413 = vmul.f32 1.0, %v1412
    %v1414 = vrcp.pop %v1391
    %v1415 = vmul.f32 1.0, %v1414
    %v1416 = vrcp.pop %v1392
    %v1417 = vmul.f32 1.0, %v1416
    %v1418 = vrcp.pop %v1393
    %v1419 = vmul.f32 1.0, %v1418
    %v1420 = vrcp.pop %v1394
    %v1421 = vmul.f32 1.0, %v1420
    %v1422 = vrcp.pop %v1395
    %v1423 = vmul.f32 1.0, %v1422
    %v1424 = vrcp.pop %v1396
    %v1425 = vmul.f32 1.0, %v1424
    %v1426 = vrcp.pop %v1397
    %v1427 = vmul.f32 1.0, %v1426
    %v1428 = vrcp.pop %v1398
    %v1429 = vmul.f32 1.0, %v1428
    %v1430 = vrcp.pop %v1399
    %v1431 = vmul.f32 1.0, %v1430
    %vm1432 = vcmask 31744
    %1433 = vst.msk [vmem:[#allocation3] sm:$0xff] %vm1432, %v1401
    %1434 = vst.msk [vmem:[#allocation3 + $0x8] sm:$0xff] %vm1432, %v1403
    %1435 = vst.msk [vmem:[#allocation3 + $0x10] sm:$0xff] %vm1432, %v1405
    %1436 = vst.msk [vmem:[#allocation3 + $0x18] sm:$0xff] %vm1432, %v1407
    %1437 = vst.msk [vmem:[#allocation3 + $0x20] sm:$0xff] %vm1432, %v1409
    %1438 = vst.msk [vmem:[#allocation3 + $0x28] sm:$0xff] %vm1432, %v1411
    %1439 = vst.msk [vmem:[#allocation3 + $0x30] sm:$0xff] %vm1432, %v1413
    %1440 = vst.msk [vmem:[#allocation3 + $0x38] sm:$0xff] %vm1432, %v1415
    %1441 = vst.msk [vmem:[#allocation3 + $0x40] sm:$0xff] %vm1432, %v1417
    %1442 = vst.msk [vmem:[#allocation3 + $0x48] sm:$0xff] %vm1432, %v1419
    %1443 = vst.msk [vmem:[#allocation3 + $0x50] sm:$0xff] %vm1432, %v1421
    %1444 = vst.msk [vmem:[#allocation3 + $0x58] sm:$0xff] %vm1432, %v1423
    %1445 = vst.msk [vmem:[#allocation3 + $0x60] sm:$0xff] %vm1432, %v1425
    %1446 = vst.msk [vmem:[#allocation3 + $0x68] sm:$0xff] %vm1432, %v1427
    %1447 = vst.msk [vmem:[#allocation3 + $0x70] sm:$0xff] %vm1432, %v1429
    %1448 = vst.msk [vmem:[#allocation3 + $0x78] sm:$0xff] %vm1432, %v1431
    // Predicated region
    $region14: #{tpu_custom_call.1} parent=1 // pred_check
      _
    $region15: #{tpu_custom_call.1} parent=1 // pred_check_branch
      %1450 = sbr.rel (0) target = $region17
    $region16: #{tpu_custom_call.1} parent=1 // pred_region
      %s1452 = ssub.s32 2048, 32
      %1453 = vsyncadd [#allocation4], %s1452
      %s1454 = sshll.u32 [#allocation3], 4
      %s1455 = int_to_ptr.vmem [resolvable:$true] %s1454
      %1460 = dma.vmem_to_hbm [thread:$0]  %s1455, 32, %s3, [#allocation4], 32, 32, 2
    $region17: #{tpu_custom_call.1} parent=1 // pred_fallthru
      _
    // Predicated region
    $region18: #{tpu_custom_call.1} parent=1 // pred_check
      _
    $region19: #{tpu_custom_call.1} parent=1 // pred_check_branch
      %1462 = sbr.rel (0) target = $region21
    $region20: #{tpu_custom_call.1} parent=1 // pred_region
      %1463 = dma.done [#allocation4], 2048
    $region21: #{tpu_custom_call.1} parent=1 // pred_fallthru
      _
    %1464 = vsyncpa [#allocation4], 1

</llo_original>
